<compile_context>
chip_gen: v6e
topology: v6e:2x2x1
jax: 0.10.0
libtpu: 0.0.40
codegen_flags: <defaults>
</compile_context>

<pallas_src>
import jax
import jax.numpy as jnp
from jax.experimental import pallas as pl
from jax.experimental.pallas import tpu as pltpu


def _round_down(v, m):
    return (v // m) * m


def _vmem_budget_bytes():
    """Generation-aware (working-set budget, vmem_limit cap) in bytes."""
    try:
        cap_bytes = pltpu.get_tpu_info().vmem_capacity_bytes
    except Exception:
        cap_bytes = 64 * 1024 * 1024  # unknown -> assume the smallest (v7x-sized)
    if cap_bytes >= 128 * 1024 * 1024:          # v5e / v6e: 128 MiB physical
        return 56 * 1024 * 1024, 64 * 1024 * 1024
    return 24 * 1024 * 1024, 32 * 1024 * 1024   # v7x: 64 MiB physical / 32 MiB scoped


def _conv1x1_kernel(x_ref, w_ref, b_ref, o_ref):
    # x_ref: (Cin, TM)  w_ref: (Cout, Cin)  b_ref: (Cout, 1)  o_ref: (Cout, TM)
    acc = jnp.dot(w_ref[...], x_ref[...], preferred_element_type=jnp.float32)
    o_ref[...] = (acc + b_ref[...]).astype(o_ref.dtype)


def _conv1x1_blocked_kernel(x_ref, w_ref, b_ref, o_ref, acc_ref):
    # x_ref: (TCI, TM)  w_ref: (TCO, TCI)  b_ref: (TCO, 1)  o_ref/acc_ref: (TCO, TM)
    k = pl.program_id(3)

    @pl.when(k == 0)
    def _():
        acc_ref[...] = jnp.zeros_like(acc_ref)

    acc_ref[...] += jnp.dot(w_ref[...], x_ref[...],
                            preferred_element_type=jnp.float32)

    @pl.when(k == pl.num_programs(3) - 1)
    def _():
        o_ref[...] = (acc_ref[...] + b_ref[...]).astype(o_ref.dtype)


def conv1x1_pallas(x_nchw, weight, bias, *, tile_m=None, tile_co=None, tile_ci=None):
    """1x1 Conv2d. x_nchw: (N, Cin, H, W); weight: (Cout, Cin, 1, 1); bias: (Cout,)."""
    N, Cin, H, W = x_nchw.shape
    Cout = weight.shape[0]
    HW = H * W

    # Free, contiguous reshapes only (no transposes / HBM round-trips).
    x3 = x_nchw.reshape(N, Cin, HW)
    w_mat = weight.reshape(Cout, Cin)
    b_col = bias.reshape(Cout, 1)

    x_ds = jnp.dtype(x_nchw.dtype).itemsize
    w_ds = jnp.dtype(w_mat.dtype).itemsize
    b_ds = jnp.dtype(b_col.dtype).itemsize
    o_ds = x_ds

    budget, vmem_cap = _vmem_budget_bytes()

    # --- decide whether the full (Cout, Cin) weight can stay resident -------------
    # Pallas allocates 2 pipeline buffers per input spec even with a constant
    # index_map, so count the weight/bias twice.
    weight_resident = 2 * (Cout * Cin * w_ds + Cout * b_ds)
    blocked = (tile_co is not None) or (tile_ci is not None) \
        or (weight_resident > budget // 2)

    if blocked:
        # Cin (reduction) blocks must tile exactly: ragged K blocks would feed
        # padded garbage into the accumulation. Cout blocks also chosen as divisors.
        if tile_ci is None:
            tile_ci = next((t for t in (512, 256, 128) if Cin % t == 0), Cin)
        if tile_co is None:
            tile_co = next((t for t in (512, 256, 128) if Cout % t == 0), Cout)
        assert Cin % tile_ci == 0 and Cout % tile_co == 0, \
            "Cout/Cin block sizes must divide the channel dims"
    else:
        tile_ci, tile_co = Cin, Cout

    # --- derive the spatial tile from the VMEM budget ------------------------------
    hw_ceil_128 = ((HW + 127) // 128) * 128
    per_col = 2 * tile_ci * x_ds + 2 * tile_co * o_ds   # double-buffered in/out tiles
    if blocked:
        per_col += 4 * tile_co                           # f32 accumulator (1 buffer)
    resident = 2 * (tile_co * tile_ci * w_ds + tile_co * b_ds)
    avail = max(budget - resident, 128 * per_col)
    if tile_m is None:
        tile_m = _round_down(avail // per_col, 128)
    tile_m = max(128, min(_round_down(int(tile_m), 128) or 128, hw_ceil_128))

    per_step_bytes = per_col * tile_m + resident
    vmem_limit = int(min(vmem_cap, max(2 * per_step_bytes, 16 * 1024 * 1024)))

    cost = pl.CostEstimate(
        flops=2 * N * Cout * Cin * HW,
        bytes_accessed=N * HW * (Cin * x_ds + Cout * o_ds)
        + Cout * Cin * w_ds + Cout * b_ds,
        transcendentals=0,
    )

    out_shape = jax.ShapeDtypeStruct((N, Cout, HW), x_nchw.dtype)

    if not blocked:
        # Spatial-tile axis leads -> even megacore split on v7x for any batch size.
        grid = (pl.cdiv(HW, tile_m), N)
        out3 = pl.pallas_call(
            _conv1x1_kernel,
            out_shape=out_shape,
            grid_spec=pltpu.PrefetchScalarGridSpec(
                num_scalar_prefetch=0,
                grid=grid,
                in_specs=[
                    # Batch dim squeezed; kernel sees (Cin, TM). Ragged last spatial
                    # block handled by Pallas (no jnp.pad copies).
                    pl.BlockSpec((None, Cin, tile_m), lambda s, n: (n, 0, s)),
                    pl.BlockSpec((Cout, Cin), lambda s, n: (0, 0)),
                    pl.BlockSpec((Cout, 1), lambda s, n: (0, 0)),
                ],
                out_specs=pl.BlockSpec((None, Cout, tile_m), lambda s, n: (n, 0, s)),
            ),
            compiler_params=pltpu.CompilerParams(
                dimension_semantics=("parallel", "parallel"),
                vmem_limit_bytes=vmem_limit,
            ),
            cost_estimate=cost,
        )(x3, w_mat, b_col)
    else:
        grid = (pl.cdiv(HW, tile_m), N, Cout // tile_co, Cin // tile_ci)
        out3 = pl.pallas_call(
            _conv1x1_blocked_kernel,
            out_shape=out_shape,
            grid_spec=pltpu.PrefetchScalarGridSpec(
                num_scalar_prefetch=0,
                grid=grid,
                in_specs=[
                    pl.BlockSpec((None, tile_ci, tile_m),
                                 lambda s, n, co, k: (n, k, s)),
                    pl.BlockSpec((tile_co, tile_ci),
                                 lambda s, n, co, k: (co, k)),
                    pl.BlockSpec((tile_co, 1),
                                 lambda s, n, co, k: (co, 0)),
                ],
                out_specs=pl.BlockSpec((None, tile_co, tile_m),
                                       lambda s, n, co, k: (n, co, s)),
                scratch_shapes=[pltpu.VMEM((tile_co, tile_m), jnp.float32)],
            ),
            compiler_params=pltpu.CompilerParams(
                dimension_semantics=("parallel", "parallel", "parallel", "arbitrary"),
                vmem_limit_bytes=vmem_limit,
            ),
            cost_estimate=cost,
        )(x3, w_mat, b_col)

    return out3.reshape(N, Cout, H, W)


class CNNDecoderPallas:
    """Mirrors CNN_decoder: a single 1x1 Conv2d(input_dim -> output_dim)."""

    def __init__(self, input_dim, output_dim, key, dtype=jnp.float32):
        kw, kb = jax.random.split(key)
        # PyTorch default init bound: 1/sqrt(fan_in); kernel_size=1 -> fan_in = Cin.
        bound = 1.0 / (input_dim ** 0.5)
        self.weight = jax.random.uniform(
            kw, (output_dim, input_dim, 1, 1), dtype, -bound, bound)
        self.bias = jax.random.uniform(kb, (output_dim,), dtype, -bound, bound)

    def __call__(self, x_nchw):
        return conv1x1_pallas(x_nchw, self.weight, self.bias)


if __name__ == "__main__":
    key = jax.random.PRNGKey(0)
    k_x, k_params, k_x2, k_w2, k_b2 = jax.random.split(key, 5)

    # --- Test 1: module-sized shapes, full-weight-resident path --------------------
    N, Cin, H, W = 2, 4, 16, 16
    Cout = 8
    x = jax.random.normal(k_x, (N, Cin, H, W), jnp.float32)
    model = CNNDecoderPallas(Cin, Cout, k_params)
    out = jax.block_until_ready(model(x))

    ref = jnp.einsum("nchw,oc->nohw", x, model.weight.reshape(Cout, Cin),
                     precision=jax.lax.Precision.HIGHEST) \
        + model.bias.reshape(1, Cout, 1, 1)
    assert out.shape == (N, Cout, H, W)
    assert jnp.allclose(out, ref, atol=1e-2, rtol=1e-2)

    # --- Test 2: force the Cout/Cin-blocked accumulator path (v7x large-config) ----
    N2, Cin2, Cout2, H2, W2 = 2, 256, 256, 16, 16
    bound2 = 1.0 / (Cin2 ** 0.5)
    x2 = jax.random.normal(k_x2, (N2, Cin2, H2, W2), jnp.float32)
    w2 = jax.random.uniform(k_w2, (Cout2, Cin2, 1, 1), jnp.float32, -bound2, bound2)
    b2 = jax.random.uniform(k_b2, (Cout2,), jnp.float32, -bound2, bound2)
    out2 = jax.block_until_ready(
        conv1x1_pallas(x2, w2, b2, tile_co=128, tile_ci=128))
    ref2 = jnp.einsum("nchw,oc->nohw", x2, w2.reshape(Cout2, Cin2),
                      precision=jax.lax.Precision.HIGHEST) \
        + b2.reshape(1, Cout2, 1, 1)
    assert out2.shape == (N2, Cout2, H2, W2)
    assert jnp.allclose(out2, ref2, atol=1e-2, rtol=1e-2)

    print("KERNEL_OK")
</pallas_src>

<mosaic_0001>
module attributes {stable_mosaic.version = 11 : i64} {
  func.func @_conv1x1_kernel(%arg0: i32, %arg1: i32, %arg2: memref<1x4x256xf32, #tpu.memory_space<vmem>>, %arg3: memref<8x4xf32, #tpu.memory_space<vmem>>, %arg4: memref<8x1xf32, #tpu.memory_space<vmem>>, %arg5: memref<1x8x256xf32, #tpu.memory_space<vmem>>) attributes {dimension_semantics = [#tpu.dimension_semantics<parallel>, #tpu.dimension_semantics<parallel>], iteration_bounds = array<i64: 1, 2>, scalar_prefetch = 0 : i64, scratch_operands = 0 : i64, tpu.core_type = #tpu.core_type<tc>, window_params = [{transform_indices = @transform_0, window_bounds = array<i64: 1, 4, 256>}, {pipeline_mode = #tpu.pipeline_mode<synchronous>, transform_indices = @transform_1, window_bounds = array<i64: 8, 4>}, {pipeline_mode = #tpu.pipeline_mode<synchronous>, transform_indices = @transform_2, window_bounds = array<i64: 8, 1>}, {transform_indices = @transform_3, window_bounds = array<i64: 1, 8, 256>}]} {
    %c0 = arith.constant 0 : index
    %c0_0 = arith.constant 0 : index
    %0 = vector.load %arg3[%c0, %c0_0] : memref<8x4xf32, #tpu.memory_space<vmem>>, vector<8x4xf32>
    %c0_1 = arith.constant 0 : index
    %c0_2 = arith.constant 0 : index
    %c0_3 = arith.constant 0 : index
    %1 = vector.load %arg2[%c0_1, %c0_2, %c0_3] : memref<1x4x256xf32, #tpu.memory_space<vmem>>, vector<1x4x256xf32>
    %2 = vector.shape_cast %1 : vector<1x4x256xf32> to vector<4x256xf32>
    %cst = arith.constant dense<0.000000e+00> : vector<8x256xf32>
    %3 = tpu.matmul %0, %2, %cst {dimension_numbers = #tpu.dot_dimension_numbers<[1], [0], [0], [1], [0, 0, 1, 1], [], []>} : vector<8x4xf32>, vector<4x256xf32>, vector<8x256xf32> -> vector<8x256xf32>
    %c0_4 = arith.constant 0 : index
    %c0_5 = arith.constant 0 : index
    %4 = vector.load %arg4[%c0_4, %c0_5] : memref<8x1xf32, #tpu.memory_space<vmem>>, vector<8x1xf32>
    %5 = vector.broadcast %4 : vector<8x1xf32> to vector<8x256xf32>
    %6 = arith.addf %3, %5 : vector<8x256xf32>
    %c0_6 = arith.constant 0 : index
    %c0_7 = arith.constant 0 : index
    %c0_8 = arith.constant 0 : index
    %7 = vector.load %arg5[%c0_6, %c0_7, %c0_8] : memref<1x8x256xf32, #tpu.memory_space<vmem>>, vector<1x8x256xf32>
    %8 = vector.shape_cast %7 : vector<1x8x256xf32> to vector<8x256xf32>
    %9 = vector.shape_cast %6 : vector<8x256xf32> to vector<1x8x256xf32>
    tpu.vector_store %arg5[%c0_6, %c0_7, %c0_8], %9 {strides = array<i32>} : memref<1x8x256xf32, #tpu.memory_space<vmem>>, vector<1x8x256xf32>,
    return
  }
  func.func @transform_0(%arg0: i32, %arg1: i32) -> (i32, i32, i32) {
    %c0_i32 = arith.constant 0 : i32
    %c0_i32_0 = arith.constant 0 : i32
    return %arg1, %c0_i32, %arg0 : i32, i32, i32
  }
  func.func @transform_1(%arg0: i32, %arg1: i32) -> (i32, i32) {
    %c0_i32 = arith.constant 0 : i32
    %c0_i32_0 = arith.constant 0 : i32
    %c0_i32_1 = arith.constant 0 : i32
    return %c0_i32, %c0_i32_0 : i32, i32
  }
  func.func @transform_2(%arg0: i32, %arg1: i32) -> (i32, i32) {
    %c0_i32 = arith.constant 0 : i32
    %c0_i32_0 = arith.constant 0 : i32
    %c0_i32_1 = arith.constant 0 : i32
    return %c0_i32, %c0_i32_0 : i32, i32
  }
  func.func @transform_3(%arg0: i32, %arg1: i32) -> (i32, i32, i32) {
    %c0_i32 = arith.constant 0 : i32
    %c0_i32_0 = arith.constant 0 : i32
    return %arg1, %c0_i32, %arg0 : i32, i32, i32
  }
}

</mosaic_0001>

<llo_original>
// kernel: tpu_custom_call.1
$region0: #{tpu_custom_call.1}
  #allocation0 [shape = 'u32[]', space=smem, size = 0x4, offset = 0x4, fixed_abs, tag = 'smem constant byte address 0x4 - core index']
  #allocation1 [shape = 'u32[144,128]{1,0:T(1,128)}', space=vmem, size = 0x12000, scoped, tag = 'internal scratch']
  %s0 = inlined_call_operand.vmem [shape: f32[2,4,256], index: 0, kind: input, shape index: {}]
  %s1 = inlined_call_operand.vmem [shape: f32[8,4], index: 1, kind: input, shape index: {}]
  %s2 = inlined_call_operand.vmem [shape: f32[8,1], index: 2, kind: input, shape index: {}]
  %s3 = inlined_call_operand.hbm [shape: f32[2,8,256], index: 3, kind: output, shape index: {}]
  %s4 = sld [smem:[#allocation0]]
  $region45: #{tpu_custom_call.1} parent=0
    _
  %s6 = ssub.s32 1, %s4
  %s7 = scalar_select 0, %s6, %s4
  $region1: #{tpu_custom_call.1} parent=0
    #allocation2 [shape = 'u8[16384]{0}', space=vmem, size = 0x4000, scoped, tag = 'output window, operand 0']
    #allocation3 [shape = 's32[2]{0}', space=sflag, size = 0x8, scoped, tag = 'scoped memory for tpu_custom_call.1']
    %8 = vsyncpa [#allocation3], 0
    %s9 = scalar_lea.sflag [#allocation3], 1
    %10 = vsyncpa %s9, 0
    loop: start=0, step=1, limit=4
    $region2: #{tpu_custom_call.1} parent=1 // loop_pre_header
      _
    $region3: #{tpu_custom_call.1} parent=1 // loop_header
      %s12 = sphi 0, %s16
      %p13 = scmp.ge.s32.totalorder %s12, 4
      %s19 = sphi 0, %s31
      %s20 = sphi 0, %s27
      %s21 = sphi 0, %s19
      %s22 = sphi 0, %s20
      %s23 = sphi 0, %s21
      %s24 = sphi 0, %s22
      %s36 = sphi 0, %s38
      %s39 = sphi 0, %s36
      %s40 = sphi 0, %s39
      %s56 = sphi 0, %s40
      %s60 = sphi 0, %s60
      %s62 = sphi 0, %s60
      %s63 = sphi 0, %s62
      %s77 = sphi 0, %s63
      %s81 = sphi 0, %s81
      %s83 = sphi 0, %s81
      %s84 = sphi 0, %s83
      %s98 = sphi 0, %s84
      %s106 = sphi 0, %s108
      %s109 = sphi 0, %s106
      %s110 = sphi 0, %s109
      %s126 = sphi 0, %s110
    $region4: #{tpu_custom_call.1} parent=1 // loop_header_branch
      %15 = sbr.rel (%p13) target = $region8
    $region5: #{tpu_custom_call.1} parent=1 // loop_body
      %s17 = ssub.s32 %s12, 1
      %s18 = ssub.s32 %s12, 2
      %s25 = sadd.s32 1, %s20
      %p26 = scmp.ge.s32.totalorder %s25, 2
      %s27 = scalar_select %p26, 0, %s25
      %s28 = sadd.s32 1, %s19
      %s29 = scalar_select %p26, %s28, %s19
      %p30 = scmp.ge.s32.totalorder %s29, 1
      %s31 = scalar_select %p30, 0, %s29
      %s32 = ssub.s32 %s20, %s27
      %s33 = ssub.s32 %s19, %s31
      %s34 = sor.u32 %s32, %s33
      %p35 = scmp.eq.s32.totalorder %s34, 0
      %s37 = sadd.s32 %s36, 1
      %s38 = scalar_select %p35, %s36, %s37
      %p41 = pneg %p35
      %p42 = scmp.eq.s32.totalorder %s12, 1
      %p43 = por %p41, %p42
      %p44 = scmp.ne.s32.totalorder %s36, %s39
      %p45 = scmp.eq.s32.totalorder %s12, 0
      %p46 = por %p44, %p45
      %p47 = scmp.ne.s32.totalorder %s36, %s39
      %p48 = scmp.eq.s32.totalorder %s17, 1
      %p49 = por %p47, %p48
      %p50 = scmp.ne.s32.totalorder %s39, %s40
      %p51 = scmp.eq.s32.totalorder %s17, 0
      %p52 = por %p50, %p51
      %p53 = scmp.ne.s32.totalorder %s39, %s40
      %p54 = scmp.eq.s32.totalorder %s18, 1
      %p55 = por %p53, %p54
      %p57 = scmp.ne.s32.totalorder %s40, %s56
      %p58 = scmp.eq.s32.totalorder %s18, 0
      %p59 = por %p57, %p58
      %s61 = sadd.s32 %s60, 1
      %p64 = scmp.eq.s32.totalorder %s12, 1
      %p65 = scmp.ne.s32.totalorder %s60, %s62
      %p66 = scmp.eq.s32.totalorder %s12, 0
      %p67 = por %p65, %p66
      %p68 = scmp.ne.s32.totalorder %s60, %s62
      %p69 = scmp.eq.s32.totalorder %s17, 1
      %p70 = por %p68, %p69
      %p71 = scmp.ne.s32.totalorder %s62, %s63
      %p72 = scmp.eq.s32.totalorder %s17, 0
      %p73 = por %p71, %p72
      %p74 = scmp.ne.s32.totalorder %s62, %s63
      %p75 = scmp.eq.s32.totalorder %s18, 1
      %p76 = por %p74, %p75
      %p78 = scmp.ne.s32.totalorder %s63, %s77
      %p79 = scmp.eq.s32.totalorder %s18, 0
      %p80 = por %p78, %p79
      %s82 = sadd.s32 %s81, 1
      %p85 = scmp.eq.s32.totalorder %s12, 1
      %p86 = scmp.ne.s32.totalorder %s81, %s83
      %p87 = scmp.eq.s32.totalorder %s12, 0
      %p88 = por %p86, %p87
      %p89 = scmp.ne.s32.totalorder %s81, %s83
      %p90 = scmp.eq.s32.totalorder %s17, 1
      %p91 = por %p89, %p90
      %p92 = scmp.ne.s32.totalorder %s83, %s84
      %p93 = scmp.eq.s32.totalorder %s17, 0
      %p94 = por %p92, %p93
      %p95 = scmp.ne.s32.totalorder %s83, %s84
      %p96 = scmp.eq.s32.totalorder %s18, 1
      %p97 = por %p95, %p96
      %p99 = scmp.ne.s32.totalorder %s84, %s98
      %p100 = scmp.eq.s32.totalorder %s18, 0
      %p101 = por %p99, %p100
      %s102 = ssub.s32 %s20, %s27
      %s103 = ssub.s32 %s19, %s31
      %s104 = sor.u32 %s102, %s103
      %p105 = scmp.eq.s32.totalorder %s104, 0
      %s107 = sadd.s32 %s106, 1
      %s108 = scalar_select %p105, %s106, %s107
      %p111 = pneg %p105
      %p112 = scmp.eq.s32.totalorder %s12, 1
      %p113 = por %p111, %p112
      %p114 = scmp.ne.s32.totalorder %s106, %s109
      %p115 = scmp.eq.s32.totalorder %s12, 0
      %p116 = por %p114, %p115
      %p117 = scmp.ne.s32.totalorder %s106, %s109
      %p118 = scmp.eq.s32.totalorder %s17, 1
      %p119 = por %p117, %p118
      %p120 = scmp.ne.s32.totalorder %s109, %s110
      %p121 = scmp.eq.s32.totalorder %s17, 0
      %p122 = por %p120, %p121
      %p123 = scmp.ne.s32.totalorder %s109, %s110
      %p124 = scmp.eq.s32.totalorder %s18, 1
      %p125 = por %p123, %p124
      %p127 = scmp.ne.s32.totalorder %s110, %s126
      %p128 = scmp.eq.s32.totalorder %s18, 0
      %p129 = por %p127, %p128
      %p130 = scmp.le.s32.totalorder 1, %s12
      %p131 = scmp.lt.s32.totalorder %s12, 3
      %p132 = pnand %p130, %p131
      %p133 = pneg %p132
      // Predicated region
      $region9: #{tpu_custom_call.1} parent=5 // pred_check
        _
      $region10: #{tpu_custom_call.1} parent=5 // pred_check_branch
        %135 = sbr.rel (%p132) target = $region12
      $region11: #{tpu_custom_call.1} parent=5 // pred_region
        %s136 = ssub.s32 %s12, 1
        // Predicated region
        $region13: #{tpu_custom_call.1} parent=11 // pred_check
          %p137 = pneg %p73
        $region14: #{tpu_custom_call.1} parent=11 // pred_check_branch
          %139 = sbr.rel (%p137) target = $region16
        $region15: #{tpu_custom_call.1} parent=11 // pred_region
          _
        $region16: #{tpu_custom_call.1} parent=11 // pred_fallthru
          _
        // Predicated region
        $region17: #{tpu_custom_call.1} parent=11 // pred_check
          %p140 = pneg %p94
        $region18: #{tpu_custom_call.1} parent=11 // pred_check_branch
          %142 = sbr.rel (%p140) target = $region20
        $region19: #{tpu_custom_call.1} parent=11 // pred_region
          _
        $region20: #{tpu_custom_call.1} parent=11 // pred_fallthru
          _
      $region12: #{tpu_custom_call.1} parent=5 // pred_fallthru
        _
      %p143 = scmp.lt.s32.totalorder %s12, 2
      // Predicated region
      $region21: #{tpu_custom_call.1} parent=5 // pred_check
        %p144 = pneg %p143
      $region22: #{tpu_custom_call.1} parent=5 // pred_check_branch
        %146 = sbr.rel (%p144) target = $region24
      $region23: #{tpu_custom_call.1} parent=5 // pred_region
        // Predicated region
        $region25: #{tpu_custom_call.1} parent=23 // pred_check
          %p147 = pneg %p46
        $region26: #{tpu_custom_call.1} parent=23 // pred_check_branch
          %149 = sbr.rel (%p147) target = $region28
        $region27: #{tpu_custom_call.1} parent=23 // pred_region
          %s150 = smul.u32 2, %s19
          %p151 = scmp.lt.s32.totalorder %s20, 1
          %s152 = scalar_select %p151, %s20, 1
          %p153 = scmp.lt.s32.totalorder %s150, 1
          %s154 = scalar_select %p153, %s150, 1
          %s155 = smul.addr %s152, 2
          %s156 = sadd.s32 %s154, %s155
          %s157 = smul.addr %s156, 4
          %s158 = scalar_lea.vmem %s0, %s157
          %s159 = smul.u32 2, %s19
        $region28: #{tpu_custom_call.1} parent=23 // pred_fallthru
          _
      $region24: #{tpu_custom_call.1} parent=5 // pred_fallthru
        _
      %p160 = scmp.le.s32.totalorder 1, %s12
      %p161 = scmp.lt.s32.totalorder %s12, 3
      %p162 = pnand %p160, %p161
      %p163 = pneg %p162
      // Predicated region
      $region29: #{tpu_custom_call.1} parent=5 // pred_check
        _
      $region30: #{tpu_custom_call.1} parent=5 // pred_check_branch
        %165 = sbr.rel (%p162) target = $region32
      $region31: #{tpu_custom_call.1} parent=5 // pred_region
        %s166 = ssub.s32 %s12, 1
        %s167 = smul.u32 2, %s21
        %p168 = scmp.lt.s32.totalorder %s22, 1
        %s169 = scalar_select %p168, %s22, 1
        %p170 = scmp.lt.s32.totalorder %s167, 1
        %s171 = scalar_select %p170, %s167, 1
        %s172 = smul.addr %s169, 2
        %s173 = sadd.s32 %s171, %s172
        %s174 = smul.addr %s173, 4
        %s175 = scalar_lea.vmem %s0, %s174
        %p176 = pneg %p52
        %p177 = pneg %p49
        %p178 = pneg %p73
        %p179 = pneg %p70
        %p180 = pneg %p94
        %p181 = pneg %p91
        %p182 = pneg %p122
        %p183 = pneg %p119
        %s184 = sand.u32 %s109, 1
        %s185 = scalar_lea.sflag [#allocation3], %s184
        %s186 = sand.u32 %s109, 1
        %s187 = smul.addr %s186, 16
        %s188 = scalar_lea.vmem [#allocation2], %s187
        %s189 = smul.u32 2, %s21
        %p190 = scmp.lt.s32.totalorder %s22, 1
        %s191 = scalar_select %p190, %s22, 1
        %p192 = scmp.lt.s32.totalorder %s189, 1
        %s193 = scalar_select %p192, %s189, 1
        %s194 = smul.addr %s191, 2
        %s195 = sadd.s32 %s193, %s194
        %s196 = smul.addr %s195, 4
        %s197 = scalar_lea.vmem %s0, %s196
        %s198 = smul.u32 2, %s21
        %s199 = smul.u32 2, %s21
        %v200 = vld [vmem:[%s1] sm:$0xff]
        %v201 = vld [vmem:[%s197] sm:$0xff]
        %v202 = vld [vmem:[%s2] sm:$0xff]
        %204 = vset.pattern.permute.xlu0 0
        %205 = vperm.xlu0 %204, %v202
        %v206 = vpop.permute.xlu0 %205
        %v209 = vcombine.high %v201, %v201
        %vm210 = vcmask 31744
        %v212 = vsel %vm210, %v200, 0
        %vm214 = vcmask 1043456
        %v215 = vsel %vm214, %v201, 0
        %v217 = vsel %vm214, %v209, 0
        %219 = vmatprep.subr.mxu0 0.0
        %220 = vmatpush1.msra.mxu0 0.0
        %221 = vmatprep.subr.mxu0 0.0
        %222 = vmatpush1.msra.mxu0 0.0
        %223 = vmatprep.subr.mxu0 0.0
        %224 = vmatpush1.msra.mxu0 0.0
        %225 = vmatprep.subr.mxu0 0.0
        %226 = vmatpush1.msra.mxu0 0.0
        %227 = vmatprep.subr.mxu0 0.0
        %228 = vmatpush1.msra.mxu0 0.0
        %229 = vmatprep.subr.mxu0 0.0
        %230 = vmatpush1.msra.mxu0 0.0
        %231 = vmatprep.subr.mxu0 0.0
        %232 = vmatpush1.msra.mxu0 0.0
        %233 = vmatprep.subr.mxu0 0.0
        %234 = vmatpush1.msra.mxu0 0.0
        %235 = vmatprep.subr.mxu0 0.0
        %236 = vmatpush1.msra.mxu0 0.0
        %237 = vmatprep.subr.mxu0 0.0
        %238 = vmatpush1.msra.mxu0 0.0
        %239 = vmatprep.subr.mxu0 0.0
        %240 = vmatpush1.msra.mxu0 0.0
        %241 = vmatprep.subr.mxu0 0.0
        %242 = vmatpush1.msra.mxu0 0.0
        %243 = vmatprep.subr.mxu0 0.0
        %244 = vmatpush1.msra.mxu0 0.0
        %245 = vmatprep.subr.mxu0 0.0
        %246 = vmatpush1.msra.mxu0 0.0
        %247 = vmatprep.subr.mxu0 0.0
        %248 = vmatpush1.msra.mxu0 0.0
        %249 = vmatprep.subr.mxu0 %v217
        %250 = vmatpush1.msra.mxu0 %v215
        %251 = vmatprep.subr.mxu0 0.0
        %252 = vmatpush2.msra.mxu0 0.0
        %253 = vmatprep.subr.mxu0 0.0
        %254 = vmatpush2.msra.mxu0 0.0
        %255 = vmatprep.subr.mxu0 0.0
        %256 = vmatpush2.msra.mxu0 0.0
        %257 = vmatprep.subr.mxu0 0.0
        %258 = vmatpush2.msra.mxu0 0.0
        %259 = vmatprep.subr.mxu0 0.0
        %260 = vmatpush2.msra.mxu0 0.0
        %261 = vmatprep.subr.mxu0 0.0
        %262 = vmatpush2.msra.mxu0 0.0
        %263 = vmatprep.subr.mxu0 0.0
        %264 = vmatpush2.msra.mxu0 0.0
        %265 = vmatprep.subr.mxu0 0.0
        %266 = vmatpush2.msra.mxu0 0.0
        %267 = vmatprep.subr.mxu0 0.0
        %268 = vmatpush2.msra.mxu0 0.0
        %269 = vmatprep.subr.mxu0 0.0
        %270 = vmatpush2.msra.mxu0 0.0
        %271 = vmatprep.subr.mxu0 0.0
        %272 = vmatpush2.msra.mxu0 0.0
        %273 = vmatprep.subr.mxu0 0.0
        %274 = vmatpush2.msra.mxu0 0.0
        %275 = vmatprep.subr.mxu0 0.0
        %276 = vmatpush2.msra.mxu0 0.0
        %277 = vmatprep.subr.mxu0 0.0
        %278 = vmatpush2.msra.mxu0 0.0
        %279 = vmatprep.subr.mxu0 0.0
        %280 = vmatpush2.msra.mxu0 0.0
        %281 = vmatprep.subr.mxu0 0.0
        %282 = vmatpush2.msra.mxu0 0.0
        %283 = vmatprep.mubr.f32.mxu0 0.0
        %284 = vmatmul.mubr.f32.gmra.mxu0 %v212
        %v285 = vpop.f32.mrf.mxu0
        %v286 = vadd.f32 %v206, %v285
        %v287 = vpop.f32.mrf.mxu0
        %v288 = vadd.f32 %v206, %v287
        %289 = vdwg.mxu0
        %290 = vst [vmem:[%s188] sm:$0xff] %v286
        %291 = vst [vmem:[%s188 + $0x8] sm:$0xff] %v288
        %s292 = sand.u32 %s109, 1
        %s293 = scalar_lea.sflag [#allocation3], %s292
        %s294 = sand.u32 %s109, 1
        %s295 = smul.addr %s294, 16
        %s296 = scalar_lea.vmem [#allocation2], %s295
        // Predicated region
        $region33: #{tpu_custom_call.1} parent=31 // pred_check
          %p297 = pneg %p119
        $region34: #{tpu_custom_call.1} parent=31 // pred_check_branch
          %299 = sbr.rel (%p297) target = $region36
        $region35: #{tpu_custom_call.1} parent=31 // pred_region
          %s300 = smul.u32 2, %s21
          %s302 = ssub.s32 256, 256
          %303 = vsyncadd %s293, %s302
          %s304 = smul.addr %s22, 2
          %s305 = sadd.s32 %s300, %s304
          %s306 = smul.addr %s305, 128
          %s307 = scalar_lea.hbm %s3, %s306
          %s309 = sshll.u32 %s296, 4
          %s310 = int_to_ptr.vmem [resolvable:$true] %s309
          %312 = dma.vmem_to_hbm [thread:$0]  %s310, 256, %s307, %s293
        $region36: #{tpu_custom_call.1} parent=31 // pred_fallthru
          _
      $region32: #{tpu_custom_call.1} parent=5 // pred_fallthru
        _
      %p313 = scmp.le.s32.totalorder 2, %s12
      // Predicated region
      $region37: #{tpu_custom_call.1} parent=5 // pred_check
        %p314 = pneg %p313
      $region38: #{tpu_custom_call.1} parent=5 // pred_check_branch
        %316 = sbr.rel (%p314) target = $region40
      $region39: #{tpu_custom_call.1} parent=5 // pred_region
        %s317 = ssub.s32 %s12, 2
        // Predicated region
        $region41: #{tpu_custom_call.1} parent=39 // pred_check
          %p318 = pneg %p125
        $region42: #{tpu_custom_call.1} parent=39 // pred_check_branch
          %320 = sbr.rel (%p318) target = $region44
        $region43: #{tpu_custom_call.1} parent=39 // pred_region
          %s321 = sand.u32 %s110, 1
          %s322 = scalar_lea.sflag [#allocation3], %s321
          %s323 = sand.u32 %s110, 1
          %s324 = smul.addr %s323, 16
          %s325 = scalar_lea.vmem [#allocation2], %s324
          %326 = dma.done %s322, 256
        $region44: #{tpu_custom_call.1} parent=39 // pred_fallthru
          _
      $region40: #{tpu_custom_call.1} parent=5 // pred_fallthru
        _
    $region6: #{tpu_custom_call.1} parent=1 // loop_footer
      %s16 = sadd.s32 1, %s12
    $region7: #{tpu_custom_call.1} parent=1 // loop_footer_branch
      %11 = sbr.rel target = $region3
    $region8: #{tpu_custom_call.1} parent=1 // loop_exit
      _
    %327 = vsyncpa [#allocation3], 1
    %s328 = scalar_lea.sflag [#allocation3], 1
    %329 = vsyncpa %s328, 1

</llo_original>
